<compile_context>
chip_gen: v5e
topology: v5e:2x2
jax: 0.10.0
libtpu: 0.0.40
codegen_flags: <defaults>
</compile_context>

<pallas_src>
import jax
import jax.numpy as jnp
from jax.experimental import pallas as pl
from jax.experimental.pallas import tpu as pltpu

_INV_SQRT2 = 0.7071067811865476
_LN_EPS = 1e-5


def _round_up(x, m):
    return (x + m - 1) // m * m


def _mlp_proj_kernel(x_ref, w1_ref, b1_ref, w2_ref, b2_ref, g_ref, beta_ref,
                     o_ref):
    """Fused Linear -> GELU(exact) -> Linear -> LayerNorm on one (tm, C) tile."""
    # Linear 1: (tm, C)bf16 @ (C, C)bf16 -> f32 accumulate, then f32 bias add.
    h = jnp.dot(x_ref[...], w1_ref[...], preferred_element_type=jnp.float32)
    h = h + b1_ref[...]

    # Exact GELU (matches torch.nn.GELU() default, approximate='none').
    # tanh-GELU would route to the EUP and free VALU slots, but changes
    # numerics vs the PyTorch module, so keep erf.
    h = 0.5 * h * (1.0 + jax.lax.erf(h * _INV_SQRT2))

    # Linear 2: (tm, C)bf16 @ (C, D)bf16 -> f32.  Single downcast of h.
    y = jnp.dot(h.astype(jnp.bfloat16), w2_ref[...],
                preferred_element_type=jnp.float32)
    y = y + b2_ref[...]

    # LayerNorm over D in f32: reuse the centered value, fold gamma into scale.
    mean = jnp.mean(y, axis=-1, keepdims=True)
    yc = y - mean
    var = jnp.mean(yc * yc, axis=-1, keepdims=True)
    scale = jax.lax.rsqrt(var + _LN_EPS) * g_ref[...]
    o_ref[...] = (yc * scale + beta_ref[...]).astype(o_ref.dtype)


def _choose_row_tile(m):
    # One MXU pass worth of rows: 256 on v6e/v7x (2x256 MXU).  Tiny problems
    # get a single tile rounded up to the sublane multiple of 8.
    # TODO(synk): drop to 128 rows when specifically targeting v5e (4x128 MXUs).
    if m <= 256:
        return max(_round_up(m, 8), 8)
    return 256


def _vmem_limit_bytes(tm, c, d):
    """Right-size the VMEM budget instead of hardcoding 64 MiB."""
    bf16, f32 = 2, 4
    x_stream = 2 * tm * c * bf16            # double-buffered input row tiles
    out_stream = 2 * tm * d * f32           # double-buffered output row tiles
    weights = 2 * (c * c + c * d) * bf16    # W1/W2 (allocator reserves 2 slots)
    vectors = 2 * (c + 3 * d) * f32         # b1, b2, gamma, beta
    live = 2 * tm * max(c, d) * f32         # f32 intermediates h / y
    need = x_stream + out_stream + weights + vectors + live
    try:
        cap = int(pltpu.get_tpu_info().vmem_capacity_bytes)
    except Exception:
        cap = 64 << 20                      # v7x per-TC VMEM (smallest modern)
    # Generous scheduler headroom, but never more than 3/4 of physical VMEM.
    return min(max(2 * need + (4 << 20), 16 << 20), (cap * 3) // 4)


@jax.jit
def mlp_proj_pallas(x2d, w1, b1, w2, b2, gamma, beta):
    """x2d: (M, C) f32.  w1: (C, C) bf16, w2: (C, D) bf16.  Returns (M, D) f32."""
    M, C = x2d.shape
    D = w2.shape[1]
    tm = _choose_row_tile(M)
    m_pad = _round_up(M, tm)

    # Feed bf16 to the MXU (also halves the x DMA traffic); mirrors the
    # PyTorch `.to(dtype=self.torch_dtype)` cast.
    x = x2d.astype(jnp.bfloat16)
    if m_pad != M:
        x = jnp.pad(x, ((0, m_pad - M), (0, 0)))

    # Constant index_map => weights/biases are fetched once and stay
    # VMEM-resident across the row grid (Pallas only re-issues a DMA when the
    # block index changes).
    resident = lambda i: (0, 0)

    out = pl.pallas_call(
        _mlp_proj_kernel,
        out_shape=jax.ShapeDtypeStruct((m_pad, D), jnp.float32),
        grid_spec=pltpu.PrefetchScalarGridSpec(
            num_scalar_prefetch=0,
            grid=(m_pad // tm,),
            in_specs=[
                pl.BlockSpec((tm, C), lambda i: (i, 0)),   # x row tiles stream
                pl.BlockSpec((C, C), resident),            # W1
                pl.BlockSpec((1, C), resident),            # b1
                pl.BlockSpec((C, D), resident),            # W2
                pl.BlockSpec((1, D), resident),            # b2
                pl.BlockSpec((1, D), resident),            # gamma
                pl.BlockSpec((1, D), resident),            # beta
            ],
            out_specs=pl.BlockSpec((tm, D), lambda i: (i, 0)),
        ),
        compiler_params=pltpu.CompilerParams(
            # Row tiles are independent: shard them across v7x's 2 TensorCores
            # (harmless on v5e/v6e).
            dimension_semantics=("parallel",),
            vmem_limit_bytes=_vmem_limit_bytes(tm, C, D),
        ),
    )(x, w1, b1.reshape(1, C), w2, b2.reshape(1, D),
      gamma.reshape(1, D), beta.reshape(1, D))

    return out[:M] if m_pad != M else out


def get_image_embeds(faceid_embeds, params):
    """Mirrors IPAdapterModule.get_image_embeds (multi-face reshape + proj)."""
    multi_face = faceid_embeds.ndim == 3
    if multi_face:
        b, n, c = faceid_embeds.shape
        x2d = faceid_embeds.reshape(b * n, c)
    else:
        x2d = faceid_embeds
    out = mlp_proj_pallas(x2d, params["w1"], params["b1"], params["w2"],
                          params["b2"], params["ln_gamma"], params["ln_beta"])
    if multi_face:
        out = out.reshape(b, -1, out.shape[-1])
    return out


def ip_adapter_forward(noisy_latents, timesteps, encoder_hidden_states,
                       image_embeds, params):
    """IPAdapterModule.forward semantics."""
    ip_tokens = get_image_embeds(image_embeds, params)
    encoder_hidden_states = jnp.concatenate(
        [encoder_hidden_states, ip_tokens], axis=1)
    # TODO(synk): the diffusers UNet (self.unet) has no Pallas equivalent here;
    # stub it as identity over noisy_latents.
    del timesteps
    noise_pred = noisy_latents
    return noise_pred, encoder_hidden_states


def _init_params(key, clip_dim, cross_dim):
    k1, k2, k3, k4 = jax.random.split(key, 4)
    # Linear weights stored as (in, out) — transpose of torch's (out, in) —
    # and kept in bf16 (MXU-native feed).
    w1 = (jax.random.normal(k1, (clip_dim, clip_dim), jnp.float32)
          * 0.02).astype(jnp.bfloat16)
    b1 = jax.random.normal(k2, (clip_dim,), jnp.float32) * 0.01
    w2 = (jax.random.normal(k3, (clip_dim, cross_dim), jnp.float32)
          * 0.02).astype(jnp.bfloat16)
    b2 = jax.random.normal(k4, (cross_dim,), jnp.float32) * 0.01
    ln_gamma = jnp.ones((cross_dim,), jnp.float32)   # PyTorch LayerNorm default
    ln_beta = jnp.zeros((cross_dim,), jnp.float32)
    return dict(w1=w1, b1=b1, w2=w2, b2=b2, ln_gamma=ln_gamma, ln_beta=ln_beta)


def _reference_proj(x2d, p):
    """Pure-JAX reference on the same bf16-weight / f32-accumulate path."""
    xb = x2d.astype(jnp.bfloat16)
    h = jnp.dot(xb, p["w1"], preferred_element_type=jnp.float32) + p["b1"]
    h = jax.nn.gelu(h, approximate=False)
    y = jnp.dot(h.astype(jnp.bfloat16), p["w2"],
                preferred_element_type=jnp.float32) + p["b2"]
    mean = jnp.mean(y, axis=-1, keepdims=True)
    var = jnp.mean((y - mean) ** 2, axis=-1, keepdims=True)
    return ((y - mean) * jax.lax.rsqrt(var + _LN_EPS) * p["ln_gamma"]
            + p["ln_beta"])


if __name__ == "__main__":
    key = jax.random.PRNGKey(0)
    k_params, k_lat, k_ehs, k_img = jax.random.split(key, 4)

    # Small shapes consistent with the module (clip/cross dims kept lane-sized,
    # i.e. multiples of 128 so the output stores stay lane-dense).
    B, N_FACES = 2, 4                 # multi-face path: image_embeds is 3-D
    CLIP_DIM, CROSS_DIM = 128, 128
    SEQ = 8                           # text tokens
    C_LAT, H_LAT, W_LAT = 4, 16, 16   # latents NCHW

    params = _init_params(k_params, CLIP_DIM, CROSS_DIM)
    noisy_latents = jax.random.normal(k_lat, (B, C_LAT, H_LAT, W_LAT),
                                      jnp.float32)
    timesteps = jnp.array([10, 20], jnp.int32)
    encoder_hidden_states = jax.random.normal(k_ehs, (B, SEQ, CROSS_DIM),
                                              jnp.float32)
    image_embeds = jax.random.normal(k_img, (B, N_FACES, CLIP_DIM), jnp.float32)

    noise_pred, ehs_out = ip_adapter_forward(
        noisy_latents, timesteps, encoder_hidden_states, image_embeds, params)
    jax.block_until_ready(noise_pred)
    jax.block_until_ready(ehs_out)

    # Sanity-check the Pallas projection against a pure-JAX reference.
    ref = _reference_proj(image_embeds.reshape(B * N_FACES, CLIP_DIM),
                          params).reshape(B, N_FACES, CROSS_DIM)
    ref_ehs = jnp.concatenate([encoder_hidden_states, ref], axis=1)
    assert ehs_out.shape == (B, SEQ + N_FACES, CROSS_DIM)
    assert jnp.allclose(ehs_out, ref_ehs, atol=5e-3, rtol=5e-3)

    print("KERNEL_OK")
</pallas_src>

<mosaic_0001>
module attributes {stable_mosaic.version = 11 : i64} {
  func.func @_mlp_proj_kernel(%arg0: i32, %arg1: memref<8x128xbf16, #tpu.memory_space<vmem>>, %arg2: memref<128x128xbf16, #tpu.memory_space<vmem>>, %arg3: memref<1x128xf32, #tpu.memory_space<vmem>>, %arg4: memref<128x128xbf16, #tpu.memory_space<vmem>>, %arg5: memref<1x128xf32, #tpu.memory_space<vmem>>, %arg6: memref<1x128xf32, #tpu.memory_space<vmem>>, %arg7: memref<1x128xf32, #tpu.memory_space<vmem>>, %arg8: memref<8x128xf32, #tpu.memory_space<vmem>>) attributes {dimension_semantics = [#tpu.dimension_semantics<parallel>], iteration_bounds = array<i64: 1>, scalar_prefetch = 0 : i64, scratch_operands = 0 : i64, tpu.core_type = #tpu.core_type<tc>, window_params = [{transform_indices = @transform_0, window_bounds = array<i64: 8, 128>}, {pipeline_mode = #tpu.pipeline_mode<synchronous>, transform_indices = @transform_1, window_bounds = array<i64: 128, 128>}, {pipeline_mode = #tpu.pipeline_mode<synchronous>, transform_indices = @transform_2, window_bounds = array<i64: 1, 128>}, {pipeline_mode = #tpu.pipeline_mode<synchronous>, transform_indices = @transform_3, window_bounds = array<i64: 128, 128>}, {pipeline_mode = #tpu.pipeline_mode<synchronous>, transform_indices = @transform_4, window_bounds = array<i64: 1, 128>}, {pipeline_mode = #tpu.pipeline_mode<synchronous>, transform_indices = @transform_5, window_bounds = array<i64: 1, 128>}, {pipeline_mode = #tpu.pipeline_mode<synchronous>, transform_indices = @transform_6, window_bounds = array<i64: 1, 128>}, {transform_indices = @transform_7, window_bounds = array<i64: 8, 128>}]} {
    %c0 = arith.constant 0 : index
    %c0_0 = arith.constant 0 : index
    %0 = vector.load %arg1[%c0, %c0_0] : memref<8x128xbf16, #tpu.memory_space<vmem>>, vector<8x128xbf16>
    %c0_1 = arith.constant 0 : index
    %c0_2 = arith.constant 0 : index
    %1 = vector.load %arg2[%c0_1, %c0_2] : memref<128x128xbf16, #tpu.memory_space<vmem>>, vector<128x128xbf16>
    %cst = arith.constant dense<0.000000e+00> : vector<8x128xf32>
    %2 = tpu.matmul %0, %1, %cst {dimension_numbers = #tpu.dot_dimension_numbers<[1], [0], [0], [1], [0, 0, 1, 1], [], []>} : vector<8x128xbf16>, vector<128x128xbf16>, vector<8x128xf32> -> vector<8x128xf32>
    %c0_3 = arith.constant 0 : index
    %c0_4 = arith.constant 0 : index
    %3 = vector.load %arg3[%c0_3, %c0_4] : memref<1x128xf32, #tpu.memory_space<vmem>>, vector<1x128xf32>
    %4 = vector.broadcast %3 : vector<1x128xf32> to vector<8x128xf32>
    %5 = arith.addf %2, %4 : vector<8x128xf32>
    %cst_5 = arith.constant 5.000000e-01 : f32
    %6 = vector.broadcast %cst_5 : f32 to vector<8x128xf32>
    %7 = arith.mulf %6, %5 : vector<8x128xf32>
    %cst_6 = arith.constant 0.707106769 : f32
    %8 = vector.broadcast %cst_6 : f32 to vector<8x128xf32>
    %9 = arith.mulf %5, %8 : vector<8x128xf32>
    %10 = math.erf %9 : vector<8x128xf32>
    %cst_7 = arith.constant 1.000000e+00 : f32
    %11 = vector.broadcast %cst_7 : f32 to vector<8x128xf32>
    %12 = arith.addf %11, %10 : vector<8x128xf32>
    %13 = arith.mulf %7, %12 : vector<8x128xf32>
    %14 = arith.truncf %13 : vector<8x128xf32> to vector<8x128xbf16>
    %c0_8 = arith.constant 0 : index
    %c0_9 = arith.constant 0 : index
    %15 = vector.load %arg4[%c0_8, %c0_9] : memref<128x128xbf16, #tpu.memory_space<vmem>>, vector<128x128xbf16>
    %cst_10 = arith.constant dense<0.000000e+00> : vector<8x128xf32>
    %16 = tpu.matmul %14, %15, %cst_10 {dimension_numbers = #tpu.dot_dimension_numbers<[1], [0], [0], [1], [0, 0, 1, 1], [], []>} : vector<8x128xbf16>, vector<128x128xbf16>, vector<8x128xf32> -> vector<8x128xf32>
    %c0_11 = arith.constant 0 : index
    %c0_12 = arith.constant 0 : index
    %17 = vector.load %arg5[%c0_11, %c0_12] : memref<1x128xf32, #tpu.memory_space<vmem>>, vector<1x128xf32>
    %18 = vector.broadcast %17 : vector<1x128xf32> to vector<8x128xf32>
    %19 = arith.addf %16, %18 : vector<8x128xf32>
    %cst_13 = arith.constant dense<0.000000e+00> : vector<8xf32>
    %20 = vector.multi_reduction <add>, %19, %cst_13 [1] : vector<8x128xf32> to vector<8xf32>
    %21 = vector.shape_cast %20 : vector<8xf32> to vector<8x1xf32>
    %cst_14 = arith.constant 1.280000e+02 : f32
    %22 = vector.broadcast %cst_14 : f32 to vector<8x1xf32>
    %23 = arith.divf %21, %22 : vector<8x1xf32>
    %24 = vector.broadcast %23 : vector<8x1xf32> to vector<8x128xf32>
    %25 = arith.subf %19, %24 : vector<8x128xf32>
    %26 = arith.mulf %25, %25 : vector<8x128xf32>
    %cst_15 = arith.constant dense<0.000000e+00> : vector<8xf32>
    %27 = vector.multi_reduction <add>, %26, %cst_15 [1] : vector<8x128xf32> to vector<8xf32>
    %28 = vector.shape_cast %27 : vector<8xf32> to vector<8x1xf32>
    %cst_16 = arith.constant 1.280000e+02 : f32
    %29 = vector.broadcast %cst_16 : f32 to vector<8x1xf32>
    %30 = arith.divf %28, %29 : vector<8x1xf32>
    %cst_17 = arith.constant 9.99999974E-6 : f32
    %31 = vector.broadcast %cst_17 : f32 to vector<8x1xf32>
    %32 = arith.addf %30, %31 : vector<8x1xf32>
    %33 = math.rsqrt %32 : vector<8x1xf32>
    %c0_18 = arith.constant 0 : index
    %c0_19 = arith.constant 0 : index
    %34 = vector.load %arg6[%c0_18, %c0_19] : memref<1x128xf32, #tpu.memory_space<vmem>>, vector<1x128xf32>
    %35 = vector.broadcast %33 : vector<8x1xf32> to vector<8x128xf32>
    %36 = vector.broadcast %34 : vector<1x128xf32> to vector<8x128xf32>
    %37 = arith.mulf %35, %36 : vector<8x128xf32>
    %38 = arith.mulf %25, %37 : vector<8x128xf32>
    %c0_20 = arith.constant 0 : index
    %c0_21 = arith.constant 0 : index
    %39 = vector.load %arg7[%c0_20, %c0_21] : memref<1x128xf32, #tpu.memory_space<vmem>>, vector<1x128xf32>
    %40 = vector.broadcast %39 : vector<1x128xf32> to vector<8x128xf32>
    %41 = arith.addf %38, %40 : vector<8x128xf32>
    %c0_22 = arith.constant 0 : index
    %c0_23 = arith.constant 0 : index
    %42 = vector.load %arg8[%c0_22, %c0_23] : memref<8x128xf32, #tpu.memory_space<vmem>>, vector<8x128xf32>
    tpu.vector_store %arg8[%c0_22, %c0_23], %41 {strides = array<i32>} : memref<8x128xf32, #tpu.memory_space<vmem>>, vector<8x128xf32>,
    return
  }
  func.func @transform_0(%arg0: i32) -> (i32, i32) {
    %c0_i32 = arith.constant 0 : i32
    %c0_i32_0 = arith.constant 0 : i32
    return %arg0, %c0_i32 : i32, i32
  }
  func.func @transform_1(%arg0: i32) -> (i32, i32) {
    %c0_i32 = arith.constant 0 : i32
    %c0_i32_0 = arith.constant 0 : i32
    %c0_i32_1 = arith.constant 0 : i32
    return %c0_i32, %c0_i32_0 : i32, i32
  }
  func.func @transform_2(%arg0: i32) -> (i32, i32) {
    %c0_i32 = arith.constant 0 : i32
    %c0_i32_0 = arith.constant 0 : i32
    %c0_i32_1 = arith.constant 0 : i32
    return %c0_i32, %c0_i32_0 : i32, i32
  }
  func.func @transform_3(%arg0: i32) -> (i32, i32) {
    %c0_i32 = arith.constant 0 : i32
    %c0_i32_0 = arith.constant 0 : i32
    %c0_i32_1 = arith.constant 0 : i32
    return %c0_i32, %c0_i32_0 : i32, i32
  }
  func.func @transform_4(%arg0: i32) -> (i32, i32) {
    %c0_i32 = arith.constant 0 : i32
    %c0_i32_0 = arith.constant 0 : i32
    %c0_i32_1 = arith.constant 0 : i32
    return %c0_i32, %c0_i32_0 : i32, i32
  }
  func.func @transform_5(%arg0: i32) -> (i32, i32) {
    %c0_i32 = arith.constant 0 : i32
    %c0_i32_0 = arith.constant 0 : i32
    %c0_i32_1 = arith.constant 0 : i32
    return %c0_i32, %c0_i32_0 : i32, i32
  }
  func.func @transform_6(%arg0: i32) -> (i32, i32) {
    %c0_i32 = arith.constant 0 : i32
    %c0_i32_0 = arith.constant 0 : i32
    %c0_i32_1 = arith.constant 0 : i32
    return %c0_i32, %c0_i32_0 : i32, i32
  }
  func.func @transform_7(%arg0: i32) -> (i32, i32) {
    %c0_i32 = arith.constant 0 : i32
    %c0_i32_0 = arith.constant 0 : i32
    return %arg0, %c0_i32 : i32, i32
  }
}

</mosaic_0001>

<llo_original>
// kernel: mlp_proj_pallas.1
$region0: #{mlp_proj_pallas.1}
  #allocation0 [shape = 'u32[]', space=smem, size = 0x4, offset = 0x4, fixed_abs, tag = 'smem constant byte address 0x4 - core index']
  #allocation1 [shape = 'u32[72,128]{1,0:T(1,128)}', space=vmem, size = 0x9000, scoped, tag = 'internal scratch']
  %s0 = inlined_call_operand.vmem [shape: bf16[8,128], index: 0, kind: input, shape index: {}]
  %s1 = inlined_call_operand.hbm [shape: bf16[128,128], index: 1, kind: input, shape index: {}]
  %s2 = inlined_call_operand.vmem [shape: f32[1,128], index: 2, kind: input, shape index: {}]
  %s3 = inlined_call_operand.hbm [shape: bf16[128,128], index: 3, kind: input, shape index: {}]
  %s4 = inlined_call_operand.vmem [shape: f32[1,128], index: 4, kind: input, shape index: {}]
  %s5 = inlined_call_operand.vmem [shape: f32[1,128], index: 5, kind: input, shape index: {}]
  %s6 = inlined_call_operand.vmem [shape: f32[1,128], index: 6, kind: input, shape index: {}]
  %s7 = inlined_call_operand.hbm [shape: f32[8,128], index: 7, kind: output, shape index: {}]
  %s8 = sld [smem:[#allocation0]]
  $region46: #{mlp_proj_pallas.1} parent=0
    _
  %s10 = ssub.s32 1, %s8
  %s11 = scalar_select 0, %s10, %s8
  $region1: #{mlp_proj_pallas.1} parent=0
    #allocation2 [shape = 'u8[32768]{0}', space=vmem, size = 0x8000, scoped, tag = 'input window, operand 1, single buffered']
    #allocation3 [shape = 's32[1]{0}', space=sflag, size = 0x4, scoped, tag = 'scoped memory for mlp_proj_pallas.1']
    #allocation4 [shape = 's32[1]{0}', space=sflag, size = 0x4, scoped, tag = 'scoped memory for mlp_proj_pallas.1']
    #allocation5 [shape = 'u8[32768]{0}', space=vmem, size = 0x8000, scoped, tag = 'input window, operand 3, single buffered']
    #allocation6 [shape = 's32[1]{0}', space=sflag, size = 0x4, scoped, tag = 'scoped memory for mlp_proj_pallas.1']
    #allocation7 [shape = 'u8[4096]{0}', space=vmem, size = 0x1000, scoped, tag = 'output window, operand 0, single buffered']
    %12 = vsyncpa [#allocation3], 0
    %13 = vsyncpa [#allocation6], 0
    %14 = vsyncpa [#allocation4], 0
    // Predicated region
    $region2: #{mlp_proj_pallas.1} parent=1 // pred_check
      _
    $region3: #{mlp_proj_pallas.1} parent=1 // pred_check_branch
      %16 = sbr.rel (0) target = $region5
    $region4: #{mlp_proj_pallas.1} parent=1 // pred_region
      _
    $region5: #{mlp_proj_pallas.1} parent=1 // pred_fallthru
      _
    // Predicated region
    $region6: #{mlp_proj_pallas.1} parent=1 // pred_check
      _
    $region7: #{mlp_proj_pallas.1} parent=1 // pred_check_branch
      %18 = sbr.rel (0) target = $region9
    $region8: #{mlp_proj_pallas.1} parent=1 // pred_region
      %20 = vsyncadd [#allocation3], 0
      %s21 = sshll.u32 %s1, 4
      %s22 = int_to_ptr.hbm [resolvable:$true] %s21
      %s23 = sshll.u32 [#allocation2], 4
      %s24 = int_to_ptr.vmem [resolvable:$true] %s23
      %29 = dma.hbm_to_vmem [thread:$0]  %s22, 1024, %s24, [#allocation3], 64, 64, 4
    $region9: #{mlp_proj_pallas.1} parent=1 // pred_fallthru
      _
    // Predicated region
    $region10: #{mlp_proj_pallas.1} parent=1 // pred_check
      _
    $region11: #{mlp_proj_pallas.1} parent=1 // pred_check_branch
      %31 = sbr.rel (0) target = $region13
    $region12: #{mlp_proj_pallas.1} parent=1 // pred_region
      _
    $region13: #{mlp_proj_pallas.1} parent=1 // pred_fallthru
      _
    // Predicated region
    $region14: #{mlp_proj_pallas.1} parent=1 // pred_check
      _
    $region15: #{mlp_proj_pallas.1} parent=1 // pred_check_branch
      %33 = sbr.rel (0) target = $region17
    $region16: #{mlp_proj_pallas.1} parent=1 // pred_region
      %35 = vsyncadd [#allocation6], 0
      %s36 = sshll.u32 %s3, 4
      %s37 = int_to_ptr.hbm [resolvable:$true] %s36
      %s38 = sshll.u32 [#allocation5], 4
      %s39 = int_to_ptr.vmem [resolvable:$true] %s38
      %44 = dma.hbm_to_vmem [thread:$0]  %s37, 1024, %s39, [#allocation6], 64, 64, 4
    $region17: #{mlp_proj_pallas.1} parent=1 // pred_fallthru
      _
    // Predicated region
    $region18: #{mlp_proj_pallas.1} parent=1 // pred_check
      _
    $region19: #{mlp_proj_pallas.1} parent=1 // pred_check_branch
      %46 = sbr.rel (0) target = $region21
    $region20: #{mlp_proj_pallas.1} parent=1 // pred_region
      _
    $region21: #{mlp_proj_pallas.1} parent=1 // pred_fallthru
      _
    // Predicated region
    $region22: #{mlp_proj_pallas.1} parent=1 // pred_check
      _
    $region23: #{mlp_proj_pallas.1} parent=1 // pred_check_branch
      %48 = sbr.rel (0) target = $region25
    $region24: #{mlp_proj_pallas.1} parent=1 // pred_region
      _
    $region25: #{mlp_proj_pallas.1} parent=1 // pred_fallthru
      _
    // Predicated region
    $region26: #{mlp_proj_pallas.1} parent=1 // pred_check
      _
    $region27: #{mlp_proj_pallas.1} parent=1 // pred_check_branch
      %50 = sbr.rel (0) target = $region29
    $region28: #{mlp_proj_pallas.1} parent=1 // pred_region
      _
    $region29: #{mlp_proj_pallas.1} parent=1 // pred_fallthru
      _
    // Predicated region
    $region30: #{mlp_proj_pallas.1} parent=1 // pred_check
      _
    $region31: #{mlp_proj_pallas.1} parent=1 // pred_check_branch
      %52 = sbr.rel (0) target = $region33
    $region32: #{mlp_proj_pallas.1} parent=1 // pred_region
      %54 = dma.done [#allocation3], 1024
    $region33: #{mlp_proj_pallas.1} parent=1 // pred_fallthru
      _
    // Predicated region
    $region34: #{mlp_proj_pallas.1} parent=1 // pred_check
      _
    $region35: #{mlp_proj_pallas.1} parent=1 // pred_check_branch
      %56 = sbr.rel (0) target = $region37
    $region36: #{mlp_proj_pallas.1} parent=1 // pred_region
      %58 = dma.done [#allocation6], 1024
    $region37: #{mlp_proj_pallas.1} parent=1 // pred_fallthru
      _
    %v59 = vld [vmem:[%s0] sm:$0xf]
    %v60 = vld [vmem:[#allocation2] sm:$0xf]
    %v61 = vld [vmem:[#allocation2 + $0x4] sm:$0xf]
    %v62 = vld [vmem:[#allocation2 + $0x8] sm:$0xf]
    %v63 = vld [vmem:[#allocation2 + $0xc] sm:$0xf]
    %v64 = vld [vmem:[#allocation2 + $0x10] sm:$0xf]
    %v65 = vld [vmem:[#allocation2 + $0x14] sm:$0xf]
    %v66 = vld [vmem:[#allocation2 + $0x18] sm:$0xf]
    %v67 = vld [vmem:[#allocation2 + $0x1c] sm:$0xf]
    %v68 = vld [vmem:[#allocation2 + $0x20] sm:$0xf]
    %v69 = vld [vmem:[#allocation2 + $0x24] sm:$0xf]
    %v70 = vld [vmem:[#allocation2 + $0x28] sm:$0xf]
    %v71 = vld [vmem:[#allocation2 + $0x2c] sm:$0xf]
    %v72 = vld [vmem:[#allocation2 + $0x30] sm:$0xf]
    %v73 = vld [vmem:[#allocation2 + $0x34] sm:$0xf]
    %v74 = vld [vmem:[#allocation2 + $0x38] sm:$0xf]
    %v75 = vld [vmem:[#allocation2 + $0x3c] sm:$0xf]
    %v76 = vld [vmem:[%s2] sm:$0x1]
    %v78 = vperm.slane %v76, 0
    %v96 = vunpack.c.l.b16 %v60
    %v97 = vunpack.c.l.b16 %v61
    %v98 = vunpack.c.l.b16 %v62
    %v99 = vunpack.c.l.b16 %v63
    %v100 = vunpack.c.l.b16 %v64
    %v101 = vunpack.c.l.b16 %v65
    %v102 = vunpack.c.l.b16 %v66
    %v103 = vunpack.c.l.b16 %v67
    %v104 = vunpack.c.l.b16 %v68
    %v105 = vunpack.c.l.b16 %v69
    %v106 = vunpack.c.l.b16 %v70
    %v107 = vunpack.c.l.b16 %v71
    %v108 = vunpack.c.l.b16 %v72
    %v109 = vunpack.c.l.b16 %v73
    %v110 = vunpack.c.l.b16 %v74
    %v111 = vunpack.c.l.b16 %v75
    %v112 = vpack.c.b16 %v97, %v96
    %v113 = vpack.c.b16 %v99, %v98
    %v114 = vpack.c.b16 %v101, %v100
    %v115 = vpack.c.b16 %v103, %v102
    %v116 = vpack.c.b16 %v105, %v104
    %v117 = vpack.c.b16 %v107, %v106
    %v118 = vpack.c.b16 %v109, %v108
    %v119 = vpack.c.b16 %v111, %v110
    %128 = vmatpush.bf16.msra.mxu0 %v119
    %129 = vmatpush.bf16.msra.mxu0 %v118
    %130 = vmatpush.bf16.msra.mxu0 %v117
    %131 = vmatpush.bf16.msra.mxu0 %v116
    %132 = vmatpush.bf16.msra.mxu0 %v115
    %133 = vmatpush.bf16.msra.mxu0 %v114
    %134 = vmatpush.bf16.msra.mxu0 %v113
    %135 = vmatpush.bf16.msra.mxu0 %v112
    %136 = vmatmul.bf16.gmra.mxu0 %v59
    %v137 = vpop.f32.mrf.mxu0
    %v138 = vadd.f32 %v78, %v137
    %v139 = vpop.f32.mrf.mxu0
    %140 = vdwg.mxu0
    %v141 = vmul.f32 %v138, 0.5
    %v142 = vmul.f32 %v138, 0.70710677
    %v143 = vmul.f32 %v142, %v142
    %v144 = vmin.f32 16.0, %v143
    %v145 = vmul.f32 %v144, 2.1237322e-06
    %v146 = vadd.f32 %v145, 0.00028619796
    %v147 = vmul.f32 %v144, %v146
    %v148 = vadd.f32 %v147, 0.0036580483
    %v149 = vmul.f32 %v144, %v148
    %v150 = vadd.f32 %v149, 0.05243302
    %v151 = vmul.f32 %v144, %v150
    %v152 = vadd.f32 %v151, 0.18741608
    %v153 = vmul.f32 %v144, %v152
    %v154 = vadd.f32 %v153, 1.1283791
    %v155 = vmul.f32 %v142, %v154
    %v156 = vmul.f32 %v144, 3.8918573e-05
    %v157 = vadd.f32 %v156, 0.001143296
    %v158 = vmul.f32 %v144, %v157
    %v159 = vadd.f32 %v158, 0.014752088
    %v160 = vmul.f32 %v144, %v159
    %v161 = vadd.f32 %v160, 0.112945676
    %v162 = vmul.f32 %v144, %v161
    %v163 = vadd.f32 %v162, 0.4994258
    %v164 = vmul.f32 %v144, %v163
    %v165 = vadd.f32 %v164, 1.0
    %v166 = vrcp.pop %v165
    %v167 = vmul.f32 %v165, %v166
    %v168 = vsub.f32 1.0, %v167
    %v169 = vmul.f32 %v166, %v168
    %v170 = vadd.f32 %v166, %v169
    %vm171 = vweird.f32 %v165
    %vm172 = vweird.f32 %v166
    %vm173 = vmor %vm171, %vm172
    %v174 = vsel %vm173, %v166, %v170
    %v175 = vand.u32 2147483647, %v165
    %vm176 = vcmp.eq.f32.partialorder %v175, 8.507059e+37
    %v177 = vand.u32 %v165, 2147483648
    %v178 = vor.u32 1.1754944e-38, %v177
    %v179 = vsel %vm176, %v178, %v174
    %v180 = vmul.f32 %v155, %v179
    %v181 = vmin.f32 %v180, 1.0
    %v182 = vmax.f32 %v181, -1.0
    %v183 = vadd.f32 %v182, 1.0
    %v184 = vmul.f32 %v141, %v183
    %v185 = vpack.c.bf16 %v184, %v184
    %v186 = vld [vmem:[#allocation5] sm:$0xf]
    %v187 = vld [vmem:[#allocation5 + $0x4] sm:$0xf]
    %v188 = vld [vmem:[#allocation5 + $0x8] sm:$0xf]
    %v189 = vld [vmem:[#allocation5 + $0xc] sm:$0xf]
    %v190 = vld [vmem:[#allocation5 + $0x10] sm:$0xf]
    %v191 = vld [vmem:[#allocation5 + $0x14] sm:$0xf]
    %v192 = vld [vmem:[#allocation5 + $0x18] sm:$0xf]
    %v193 = vld [vmem:[#allocation5 + $0x1c] sm:$0xf]
    %v194 = vld [vmem:[#allocation5 + $0x20] sm:$0xf]
    %v195 = vld [vmem:[#allocation5 + $0x24] sm:$0xf]
    %v196 = vld [vmem:[#allocation5 + $0x28] sm:$0xf]
    %v197 = vld [vmem:[#allocation5 + $0x2c] sm:$0xf]
    %v198 = vld [vmem:[#allocation5 + $0x30] sm:$0xf]
    %v199 = vld [vmem:[#allocation5 + $0x34] sm:$0xf]
    %v200 = vld [vmem:[#allocation5 + $0x38] sm:$0xf]
    %v201 = vld [vmem:[#allocation5 + $0x3c] sm:$0xf]
    %v202 = vld [vmem:[%s4] sm:$0x1]
    %v204 = vperm.slane %v202, 0
    %v222 = vunpack.c.l.b16 %v186
    %v223 = vunpack.c.l.b16 %v187
    %v224 = vunpack.c.l.b16 %v188
    %v225 = vunpack.c.l.b16 %v189
    %v226 = vunpack.c.l.b16 %v190
    %v227 = vunpack.c.l.b16 %v191
    %v228 = vunpack.c.l.b16 %v192
    %v229 = vunpack.c.l.b16 %v193
    %v230 = vunpack.c.l.b16 %v194
    %v231 = vunpack.c.l.b16 %v195
    %v232 = vunpack.c.l.b16 %v196
    %v233 = vunpack.c.l.b16 %v197
    %v234 = vunpack.c.l.b16 %v198
    %v235 = vunpack.c.l.b16 %v199
    %v236 = vunpack.c.l.b16 %v200
    %v237 = vunpack.c.l.b16 %v201
    %v238 = vpack.c.b16 %v223, %v222
    %v239 = vpack.c.b16 %v225, %v224
    %v240 = vpack.c.b16 %v227, %v226
    %v241 = vpack.c.b16 %v229, %v228
    %v242 = vpack.c.b16 %v231, %v230
    %v243 = vpack.c.b16 %v233, %v232
    %v244 = vpack.c.b16 %v235, %v234
    %v245 = vpack.c.b16 %v237, %v236
    %254 = vmatpush.bf16.msra.mxu0 %v245
    %255 = vmatpush.bf16.msra.mxu0 %v244
    %256 = vmatpush.bf16.msra.mxu0 %v243
    %257 = vmatpush.bf16.msra.mxu0 %v242
    %258 = vmatpush.bf16.msra.mxu0 %v241
    %259 = vmatpush.bf16.msra.mxu0 %v240
    %260 = vmatpush.bf16.msra.mxu0 %v239
    %261 = vmatpush.bf16.msra.mxu0 %v238
    %262 = vmatmul.bf16.gmra.mxu0 %v185
    %v263 = vpop.f32.mrf.mxu0
    %v264 = vadd.f32 %v204, %v263
    %v265 = vpop.f32.mrf.mxu0
    %266 = vdwg.mxu0
    %267 = vadd.xlane.f32.xlu0 %v264
    %v268 = vpop.xlane.xlu0 %267
    %v269 = vrcp.pop 128.0
    %v270 = vmul.f32 128.0, %v269
    %v271 = vsub.f32 1.0, %v270
    %v272 = vmul.f32 %v269, %v271
    %v273 = vadd.f32 %v269, %v272
    %vm274 = vweird.f32 %v269
    %v275 = vsel %vm274, %v269, %v273
    %v276 = vmul.f32 %v268, %v275
    %v277 = vsub.f32 %v264, %v276
    %v278 = vmul.f32 %v277, %v277
    %279 = vadd.xlane.f32.xlu0 %v278
    %v280 = vpop.xlane.xlu0 %279
    %v281 = vmul.f32 %v280, %v275
    %v282 = vadd.f32 %v281, 1e-05
    %v283 = vrsqrt.pop %v282
    %v284 = vmul.f32 %v283, %v282
    %v285 = vmul.f32 %v284, %v283
    %v286 = vmul.f32 0.5, %v285
    %v287 = vsub.f32 1.5, %v286
    %v288 = vmul.f32 %v283, %v287
    %vm289 = vweird.f32 %v282
    %vm290 = vweird.f32 %v283
    %vm291 = vmor %vm289, %vm290
    %v292 = vsel %vm291, %v283, %v288
    %v293 = vld [vmem:[%s5] sm:$0x1]
    %v295 = vperm.slane %v293, 0
    %v297 = vmul.f32 %v292, %v295
    %v298 = vmul.f32 %v277, %v297
    %v299 = vld [vmem:[%s6] sm:$0x1]
    %v301 = vperm.slane %v299, 0
    %v303 = vadd.f32 %v298, %v301
    %304 = vst [vmem:[#allocation7] sm:$0xff] %v303
    // Predicated region
    $region38: #{mlp_proj_pallas.1} parent=1 // pred_check
      _
    $region39: #{mlp_proj_pallas.1} parent=1 // pred_check_branch
      %306 = sbr.rel (0) target = $region41
    $region40: #{mlp_proj_pallas.1} parent=1 // pred_region
      %308 = vsyncadd [#allocation4], 0
      %s310 = sshll.u32 [#allocation7], 4
      %s311 = int_to_ptr.vmem [resolvable:$true] %s310
      %s312 = sshll.u32 %s7, 4
      %s313 = int_to_ptr.hbm [resolvable:$true] %s312
      %315 = dma.vmem_to_hbm [thread:$0]  %s311, 128, %s313, [#allocation4]
    $region41: #{mlp_proj_pallas.1} parent=1 // pred_fallthru
      _
    // Predicated region
    $region42: #{mlp_proj_pallas.1} parent=1 // pred_check
      _
    $region43: #{mlp_proj_pallas.1} parent=1 // pred_check_branch
      %317 = sbr.rel (0) target = $region45
    $region44: #{mlp_proj_pallas.1} parent=1 // pred_region
      %319 = dma.done [#allocation4], 128
    $region45: #{mlp_proj_pallas.1} parent=1 // pred_fallthru
      _
    %320 = vsyncpa [#allocation3], 1
    %321 = vsyncpa [#allocation6], 1
    %322 = vsyncpa [#allocation4], 1

</llo_original>
